<compile_context>
chip_gen: v7x
topology: tpu7x:2x2x1
jax: 0.10.0
libtpu: 0.0.40
codegen_flags: <defaults>
</compile_context>

<pallas_src>
import jax
import jax.numpy as jnp
from jax.experimental import pallas as pl
from jax.experimental.pallas import tpu as pltpu


def _attention_dot_kernel(seq_ref, cond_ref, out_ref):
    # seq_ref : (TB, S, H)   cond_ref : (TB, H)   out_ref : (TB, H)
    seq = seq_ref[...].astype(jnp.float32)              # (TB, S, H)
    cond = cond_ref[...].astype(jnp.float32)            # (TB, H)

    # --- score (method='dot'): elementwise mul + lane reduce over hidden ---
    scores = jnp.sum(seq * cond[:, None, :], axis=-1)   # (TB, S)

    # --- softmax over seq_len ---
    m = jnp.max(scores, axis=-1, keepdims=True)
    e = jnp.exp(scores - m)
    denom = jnp.sum(e, axis=-1, keepdims=True)
    probs = e * pl.reciprocal(denom, approx=True)       # (TB, S)

    # --- weighted average on the VPU/XLU (tiny per-row matmuls would
    #     underfill the MXU): broadcast-mul + sublane reduce over S ---
    w = jnp.sum(probs[:, :, None] * seq, axis=1)        # (TB, H)

    out_ref[...] = w.astype(out_ref.dtype)

    # TODO(synk): optional length-based masking (scores[i, lengths[i]:] = -inf)
    # is not implemented; the reference forward is exercised with lengths=None.


def _round_up(x, m):
    return ((x + m - 1) // m) * m


def attention_dot(sequence, condition, *, block_b=None,
                  vmem_budget_bytes=8 * 1024 * 1024):
    """sequence: (B, S, H), condition: (B, H) -> weights: (B, H)."""
    B, S, H = sequence.shape
    assert condition.shape == (B, H)
    itemsize = jnp.dtype(sequence.dtype).itemsize

    if block_b is None:
        # Double-buffered seq tile dominates VMEM usage; size block_b so the
        # whole working set fits comfortably under the smallest default scoped
        # VMEM (v5e: 16 MiB) without any compiler-flag overrides.
        per_row_bytes = 2 * S * H * itemsize + 4 * H * itemsize
        block_b = max(8, vmem_budget_bytes // max(per_row_bytes, 1))
        block_b = (block_b // 8) * 8
    block_b = min(block_b, _round_up(B, 8))

    # Pad batch to a multiple of block_b (zero rows softmax to uniform probs
    # over zero vectors -> zero output; sliced off below).
    B_pad = _round_up(B, block_b)
    if B_pad != B:
        pad = B_pad - B
        sequence = jnp.concatenate(
            [sequence, jnp.zeros((pad, S, H), sequence.dtype)], axis=0)
        condition = jnp.concatenate(
            [condition, jnp.zeros((pad, H), condition.dtype)], axis=0)

    grid = (B_pad // block_b,)

    cost = pl.CostEstimate(
        flops=4 * B_pad * S * H,                 # score mul+add, wsum mul+add
        transcendentals=B_pad * S,               # exp in softmax
        bytes_accessed=itemsize * (B_pad * S * H + 2 * B_pad * H),
    )

    out = pl.pallas_call(
        _attention_dot_kernel,
        out_shape=jax.ShapeDtypeStruct((B_pad, H), sequence.dtype),
        grid_spec=pltpu.PrefetchScalarGridSpec(
            num_scalar_prefetch=0,
            grid=grid,
            in_specs=[
                pl.BlockSpec((block_b, S, H), lambda i: (i, 0, 0)),
                pl.BlockSpec((block_b, H), lambda i: (i, 0)),
            ],
            out_specs=pl.BlockSpec((block_b, H), lambda i: (i, 0)),
        ),
        compiler_params=pltpu.CompilerParams(
            dimension_semantics=("parallel",)),   # v7x: shard batch tiles on 2 TCs
        cost_estimate=cost,
    )(sequence, condition)

    return out[:B]


def _attention_dot_ref(sequence, condition):
    scores = jnp.sum(sequence * condition[:, None, :], axis=-1)
    probs = jax.nn.softmax(scores, axis=1)
    return jnp.einsum("bs,bsh->bh", probs, sequence)


if __name__ == "__main__":
    key = jax.random.PRNGKey(0)
    k1, k2 = jax.random.split(key)

    B, S, H = 2, 8, 32
    sequence = jax.random.normal(k1, (B, S, H), dtype=jnp.float32)
    condition = jax.random.normal(k2, (B, H), dtype=jnp.float32)

    weights = attention_dot(sequence, condition)
    jax.block_until_ready(weights)

    ref = _attention_dot_ref(sequence, condition)
    assert weights.shape == (B, H)
    # approx reciprocal in the softmax denominator -> slightly looser tolerance
    assert jnp.allclose(weights, ref, atol=2e-3, rtol=2e-3)

    print("KERNEL_OK")
</pallas_src>

<mosaic_0001>
module attributes {stable_mosaic.version = 11 : i64} {
  func.func @_attention_dot_kernel(%arg0: i32, %arg1: memref<8x8x32xf32, #tpu.memory_space<vmem>>, %arg2: memref<8x32xf32, #tpu.memory_space<vmem>>, %arg3: memref<8x32xf32, #tpu.memory_space<vmem>>) attributes {dimension_semantics = [#tpu.dimension_semantics<parallel>], iteration_bounds = array<i64: 1>, scalar_prefetch = 0 : i64, scratch_operands = 0 : i64, tpu.core_type = #tpu.core_type<tc>, window_params = [{transform_indices = @transform_0, window_bounds = array<i64: 8, 8, 32>}, {transform_indices = @transform_1, window_bounds = array<i64: 8, 32>}, {transform_indices = @transform_2, window_bounds = array<i64: 8, 32>}]} {
    %c0 = arith.constant 0 : index
    %c0_0 = arith.constant 0 : index
    %c0_1 = arith.constant 0 : index
    %0 = vector.load %arg1[%c0, %c0_0, %c0_1] : memref<8x8x32xf32, #tpu.memory_space<vmem>>, vector<8x8x32xf32>
    %c0_2 = arith.constant 0 : index
    %c0_3 = arith.constant 0 : index
    %1 = vector.load %arg2[%c0_2, %c0_3] : memref<8x32xf32, #tpu.memory_space<vmem>>, vector<8x32xf32>
    %2 = vector.shape_cast %1 : vector<8x32xf32> to vector<8x1x32xf32>
    %3 = vector.broadcast %2 : vector<8x1x32xf32> to vector<8x8x32xf32>
    %4 = arith.mulf %0, %3 : vector<8x8x32xf32>
    %cst = arith.constant dense<0.000000e+00> : vector<8x8xf32>
    %5 = vector.multi_reduction <add>, %4, %cst [2] : vector<8x8x32xf32> to vector<8x8xf32>
    %cst_4 = arith.constant dense<0xFF800000> : vector<8xf32>
    %6 = vector.multi_reduction <maximumf>, %5, %cst_4 [1] : vector<8x8xf32> to vector<8xf32>
    %7 = vector.shape_cast %6 : vector<8xf32> to vector<8x1xf32>
    %8 = vector.broadcast %7 : vector<8x1xf32> to vector<8x8xf32>
    %9 = arith.subf %5, %8 : vector<8x8xf32>
    %10 = math.exp %9 : vector<8x8xf32>
    %cst_5 = arith.constant dense<0.000000e+00> : vector<8xf32>
    %11 = vector.multi_reduction <add>, %10, %cst_5 [1] : vector<8x8xf32> to vector<8xf32>
    %12 = vector.shape_cast %11 : vector<8xf32> to vector<8x1xf32>
    %13 = tpu.reciprocal %12 {approx = true} : vector<8x1xf32> -> vector<8x1xf32>
    %14 = vector.broadcast %13 : vector<8x1xf32> to vector<8x8xf32>
    %15 = arith.mulf %10, %14 : vector<8x8xf32>
    %16 = vector.shape_cast %15 : vector<8x8xf32> to vector<8x8x1xf32>
    %17 = vector.broadcast %16 : vector<8x8x1xf32> to vector<8x8x32xf32>
    %18 = arith.mulf %17, %0 : vector<8x8x32xf32>
    %cst_6 = arith.constant dense<0.000000e+00> : vector<8x32xf32>
    %19 = vector.multi_reduction <add>, %18, %cst_6 [1] : vector<8x8x32xf32> to vector<8x32xf32>
    %c0_7 = arith.constant 0 : index
    %c0_8 = arith.constant 0 : index
    %20 = vector.load %arg3[%c0_7, %c0_8] : memref<8x32xf32, #tpu.memory_space<vmem>>, vector<8x32xf32>
    tpu.vector_store %arg3[%c0_7, %c0_8], %19 {strides = array<i32>} : memref<8x32xf32, #tpu.memory_space<vmem>>, vector<8x32xf32>,
    return
  }
  func.func @transform_0(%arg0: i32) -> (i32, i32, i32) {
    %c0_i32 = arith.constant 0 : i32
    %c0_i32_0 = arith.constant 0 : i32
    %c0_i32_1 = arith.constant 0 : i32
    return %arg0, %c0_i32, %c0_i32_0 : i32, i32, i32
  }
  func.func @transform_1(%arg0: i32) -> (i32, i32) {
    %c0_i32 = arith.constant 0 : i32
    %c0_i32_0 = arith.constant 0 : i32
    return %arg0, %c0_i32 : i32, i32
  }
  func.func @transform_2(%arg0: i32) -> (i32, i32) {
    %c0_i32 = arith.constant 0 : i32
    %c0_i32_0 = arith.constant 0 : i32
    return %arg0, %c0_i32 : i32, i32
  }
}

</mosaic_0001>

<llo_original>
// kernel: tpu_custom_call.1
$region0: #{tpu_custom_call.1}
  #allocation0 [shape = 'u32[]', space=smem, size = 0x4, offset = 0x4, fixed_abs, tag = 'smem constant byte address 0x4 - core index']
  #allocation1 [shape = 'u32[144,128]{1,0:T(1,128)}', space=vmem, size = 0x12000, scoped, tag = 'internal scratch']
  %s0 = inlined_call_operand.hbm [shape: f32[8,8,32], index: 0, kind: input, shape index: {}]
  %s1 = inlined_call_operand.hbm [shape: f32[8,32], index: 1, kind: input, shape index: {}]
  %s2 = inlined_call_operand.hbm [shape: f32[8,32], index: 2, kind: output, shape index: {}]
  %s3 = sld [smem:[#allocation0]]
  $region26: #{tpu_custom_call.1} parent=0
    _
  %s5 = ssub.s32 1, %s3
  %s6 = scalar_select 0, %s5, %s3
  $region1: #{tpu_custom_call.1} parent=0
    #allocation2 [shape = 'u8[32768]{0}', space=vmem, size = 0x8000, scoped, tag = 'input window, operand 0, single buffered']
    #allocation3 [shape = 's32[1]{0}', space=sflag, size = 0x4, scoped, tag = 'scoped memory for tpu_custom_call.1']
    #allocation4 [shape = 's32[1]{0}', space=sflag, size = 0x4, scoped, tag = 'scoped memory for tpu_custom_call.1']
    #allocation5 [shape = 'u8[4096]{0}', space=vmem, size = 0x1000, scoped, tag = 'input window, operand 1, single buffered']
    #allocation6 [shape = 's32[1]{0}', space=sflag, size = 0x4, scoped, tag = 'scoped memory for tpu_custom_call.1']
    #allocation7 [shape = 'u8[4096]{0}', space=vmem, size = 0x1000, scoped, tag = 'output window, operand 0, single buffered']
    %7 = vsyncpa [#allocation3], 0
    %8 = vsyncpa [#allocation6], 0
    %9 = vsyncpa [#allocation4], 0
    // Predicated region
    $region2: #{tpu_custom_call.1} parent=1 // pred_check
      _
    $region3: #{tpu_custom_call.1} parent=1 // pred_check_branch
      %11 = sbr.rel (0) target = $region5
    $region4: #{tpu_custom_call.1} parent=1 // pred_region
      %s13 = ssub.s32 1024, 1024
      %14 = vsyncadd [#allocation3], %s13
      %s15 = sshll.u32 [#allocation2], 4
      %s16 = int_to_ptr.vmem [resolvable:$true] %s15
      %21 = dma.hbm_to_vmem [thread:$0]  %s0, 1024, %s16, [#allocation3], 128, 128, 8
    $region5: #{tpu_custom_call.1} parent=1 // pred_fallthru
      _
    // Predicated region
    $region6: #{tpu_custom_call.1} parent=1 // pred_check
      _
    $region7: #{tpu_custom_call.1} parent=1 // pred_check_branch
      %23 = sbr.rel (0) target = $region9
    $region8: #{tpu_custom_call.1} parent=1 // pred_region
      %s25 = ssub.s32 128, 128
      %26 = vsyncadd [#allocation6], %s25
      %s28 = sshll.u32 [#allocation5], 4
      %s29 = int_to_ptr.vmem [resolvable:$true] %s28
      %31 = dma.hbm_to_vmem [thread:$0]  %s1, 128, %s29, [#allocation6]
    $region9: #{tpu_custom_call.1} parent=1 // pred_fallthru
      _
    // Predicated region
    $region10: #{tpu_custom_call.1} parent=1 // pred_check
      _
    $region11: #{tpu_custom_call.1} parent=1 // pred_check_branch
      %33 = sbr.rel (0) target = $region13
    $region12: #{tpu_custom_call.1} parent=1 // pred_region
      %34 = dma.done [#allocation3], 1024
    $region13: #{tpu_custom_call.1} parent=1 // pred_fallthru
      _
    // Predicated region
    $region14: #{tpu_custom_call.1} parent=1 // pred_check
      _
    $region15: #{tpu_custom_call.1} parent=1 // pred_check_branch
      %36 = sbr.rel (0) target = $region17
    $region16: #{tpu_custom_call.1} parent=1 // pred_region
      %37 = dma.done [#allocation6], 128
    $region17: #{tpu_custom_call.1} parent=1 // pred_fallthru
      _
    %v38 = vld [vmem:[#allocation2] sm:$0xff]
    %v39 = vld [vmem:[#allocation2 + $0x8] sm:$0xff]
    %v40 = vld [vmem:[#allocation2 + $0x10] sm:$0xff]
    %v41 = vld [vmem:[#allocation2 + $0x18] sm:$0xff]
    %v42 = vld [vmem:[#allocation2 + $0x20] sm:$0xff]
    %v43 = vld [vmem:[#allocation2 + $0x28] sm:$0xff]
    %v44 = vld [vmem:[#allocation2 + $0x30] sm:$0xff]
    %v45 = vld [vmem:[#allocation2 + $0x38] sm:$0xff]
    %v46 = vld [vmem:[#allocation5] sm:$0xff]
    %v48 = vcombine.high %v46, %v46
    %v50 = vunpack.c.l.s4 1966171168
    %v51 = vunpack.c.0.s8 %v50
    %v52 = vlaneseq
    %v53 = vshrl.u32 %v52, 7
    %v54 = vsub.s32 %v51, %v53
    %v55 = vrot.slane %v46, %v54
    %v57 = vunpack.c.l.s4 1966171168
    %v58 = vunpack.c.0.s8 %v57
    %v59 = vlaneseq
    %v60 = vshrl.u32 %v59, 7
    %v61 = vsub.s32 %v58, %v60
    %v62 = vrot.slane %v48, %v61
    %v63 = vcombine.high %v55, %v55
    %v64 = vcombine.high %v62, %v62
    %v66 = vunpack.c.l.s4 1966171168
    %v67 = vunpack.c.0.s8 %v66
    %v68 = vlaneseq
    %v69 = vshrl.u32 %v68, 7
    %v70 = vsub.s32 %v67, %v69
    %v71 = vrot.slane %v55, %v70
    %v73 = vunpack.c.l.s4 1966171168
    %v74 = vunpack.c.0.s8 %v73
    %v75 = vlaneseq
    %v76 = vshrl.u32 %v75, 7
    %v77 = vsub.s32 %v74, %v76
    %v78 = vrot.slane %v62, %v77
    %v80 = vunpack.c.l.s4 1966171168
    %v81 = vunpack.c.0.s8 %v80
    %v82 = vlaneseq
    %v83 = vshrl.u32 %v82, 7
    %v84 = vsub.s32 %v81, %v83
    %v85 = vrot.slane %v63, %v84
    %v87 = vunpack.c.l.s4 1966171168
    %v88 = vunpack.c.0.s8 %v87
    %v89 = vlaneseq
    %v90 = vshrl.u32 %v89, 7
    %v91 = vsub.s32 %v88, %v90
    %v92 = vrot.slane %v64, %v91
    %v93 = vcombine.high %v71, %v71
    %v94 = vcombine.high %v78, %v78
    %v95 = vcombine.high %v85, %v85
    %v96 = vcombine.high %v92, %v92
    %v97 = vlaneseq
    %v98 = vshrl.u32 %v97, 7
    %v99 = vsub.s32 0, %v98
    %v100 = vrot.slane %v71, %v99
    %v101 = vlaneseq
    %v102 = vshrl.u32 %v101, 7
    %v103 = vsub.s32 0, %v102
    %v104 = vrot.slane %v85, %v103
    %v105 = vlaneseq
    %v106 = vshrl.u32 %v105, 7
    %v107 = vsub.s32 0, %v106
    %v108 = vrot.slane %v93, %v107
    %v109 = vlaneseq
    %v110 = vshrl.u32 %v109, 7
    %v111 = vsub.s32 0, %v110
    %v112 = vrot.slane %v95, %v111
    %v113 = vlaneseq
    %v114 = vshrl.u32 %v113, 7
    %v115 = vsub.s32 0, %v114
    %v116 = vrot.slane %v78, %v115
    %v117 = vlaneseq
    %v118 = vshrl.u32 %v117, 7
    %v119 = vsub.s32 0, %v118
    %v120 = vrot.slane %v92, %v119
    %v121 = vlaneseq
    %v122 = vshrl.u32 %v121, 7
    %v123 = vsub.s32 0, %v122
    %v124 = vrot.slane %v94, %v123
    %v125 = vlaneseq
    %v126 = vshrl.u32 %v125, 7
    %v127 = vsub.s32 0, %v126
    %v128 = vrot.slane %v96, %v127
    %v137 = vmul.f32 %v38, %v100
    %v138 = vmul.f32 %v39, %v104
    %v139 = vmul.f32 %v40, %v108
    %v140 = vmul.f32 %v41, %v112
    %v141 = vmul.f32 %v42, %v116
    %v142 = vmul.f32 %v43, %v120
    %v143 = vmul.f32 %v44, %v124
    %v144 = vmul.f32 %v45, %v128
    %vm145 = vcmask 261120
    %v146 = vsel %vm145, %v137, 0.0
    %147 = vadd.xlane.f32.xlu0 %v146
    %v148 = vpop.xlane.xlu0 %147
    %v149 = vsel %vm145, %v138, 0.0
    %150 = vadd.xlane.f32.xlu0 %v149
    %v151 = vpop.xlane.xlu0 %150
    %v152 = vsel %vm145, %v139, 0.0
    %153 = vadd.xlane.f32.xlu0 %v152
    %v154 = vpop.xlane.xlu0 %153
    %v155 = vsel %vm145, %v140, 0.0
    %156 = vadd.xlane.f32.xlu0 %v155
    %v157 = vpop.xlane.xlu0 %156
    %v158 = vsel %vm145, %v141, 0.0
    %159 = vadd.xlane.f32.xlu0 %v158
    %v160 = vpop.xlane.xlu0 %159
    %v161 = vsel %vm145, %v142, 0.0
    %162 = vadd.xlane.f32.xlu0 %v161
    %v163 = vpop.xlane.xlu0 %162
    %v164 = vsel %vm145, %v143, 0.0
    %165 = vadd.xlane.f32.xlu0 %v164
    %v166 = vpop.xlane.xlu0 %165
    %v167 = vsel %vm145, %v144, 0.0
    %168 = vadd.xlane.f32.xlu0 %v167
    %v169 = vpop.xlane.xlu0 %168
    %v178 = vlaneseq
    %v179 = vand.u32 %v178, 127
    %v180 = vlaneseq
    %v181 = vshrl.u32 %v180, 7
    %v182 = vsub.s32 %v179, %v181
    %v183 = vrot.slane %v148, %v182
    %v184 = vlaneseq
    %v185 = vshrl.u32 %v184, 7
    %v186 = vsub.s32 %v179, %v185
    %v187 = vrot.slane %v151, %v186
    %v188 = vlaneseq
    %v189 = vshrl.u32 %v188, 7
    %v190 = vsub.s32 %v179, %v189
    %v191 = vrot.slane %v154, %v190
    %v192 = vlaneseq
    %v193 = vshrl.u32 %v192, 7
    %v194 = vsub.s32 %v179, %v193
    %v195 = vrot.slane %v157, %v194
    %v196 = vlaneseq
    %v197 = vshrl.u32 %v196, 7
    %v198 = vsub.s32 %v179, %v197
    %v199 = vrot.slane %v160, %v198
    %v200 = vlaneseq
    %v201 = vshrl.u32 %v200, 7
    %v202 = vsub.s32 %v179, %v201
    %v203 = vrot.slane %v163, %v202
    %v204 = vlaneseq
    %v205 = vshrl.u32 %v204, 7
    %v206 = vsub.s32 %v179, %v205
    %v207 = vrot.slane %v166, %v206
    %v208 = vlaneseq
    %v209 = vshrl.u32 %v208, 7
    %v210 = vsub.s32 %v179, %v209
    %v211 = vrot.slane %v169, %v210
    %vm212 = vcmask 1041409
    %v213 = vsel %vm212, %v187, %v183
    %vm214 = vcmask 1042434
    %v215 = vsel %vm214, %v191, %v213
    %vm216 = vcmask 1043459
    %v217 = vsel %vm216, %v195, %v215
    %vm218 = vcmask 1044484
    %v219 = vsel %vm218, %v199, %v217
    %vm220 = vcmask 1045509
    %v221 = vsel %vm220, %v203, %v219
    %vm222 = vcmask 1046534
    %v223 = vsel %vm222, %v207, %v221
    %vm224 = vcmask 1047559
    %v225 = vsel %vm224, %v211, %v223
    %vm227 = vcmask 64512
    %v228 = vsel %vm227, %v225, -inf
    %229 = vmax.xlane.f32.xlu0 %v228
    %v230 = vpop.xlane.xlu0 %229
    %v232 = vlaneseq
    %v233 = vshrl.u32 %v232, 7
    %v234 = vsub.s32 0, %v233
    %v235 = vrot.slane %v230, %v234
    %v236 = vlaneseq
    %v237 = vshrl.u32 %v236, 7
    %v238 = vsub.s32 1, %v237
    %v239 = vrot.slane %v230, %v238
    %v240 = vlaneseq
    %v241 = vshrl.u32 %v240, 7
    %v242 = vsub.s32 2, %v241
    %v243 = vrot.slane %v230, %v242
    %v244 = vlaneseq
    %v245 = vshrl.u32 %v244, 7
    %v246 = vsub.s32 3, %v245
    %v247 = vrot.slane %v230, %v246
    %v248 = vlaneseq
    %v249 = vshrl.u32 %v248, 7
    %v250 = vsub.s32 4, %v249
    %v251 = vrot.slane %v230, %v250
    %v252 = vlaneseq
    %v253 = vshrl.u32 %v252, 7
    %v254 = vsub.s32 5, %v253
    %v255 = vrot.slane %v230, %v254
    %v256 = vlaneseq
    %v257 = vshrl.u32 %v256, 7
    %v258 = vsub.s32 6, %v257
    %v259 = vrot.slane %v230, %v258
    %v260 = vlaneseq
    %v261 = vshrl.u32 %v260, 7
    %v262 = vsub.s32 7, %v261
    %v263 = vrot.slane %v230, %v262
    %v272 = vsub.f32 %v148, %v235
    %v273 = vsub.f32 %v151, %v239
    %v274 = vsub.f32 %v154, %v243
    %v275 = vsub.f32 %v157, %v247
    %v276 = vsub.f32 %v160, %v251
    %v277 = vsub.f32 %v163, %v255
    %v278 = vsub.f32 %v166, %v259
    %v279 = vsub.f32 %v169, %v263
    %v280 = vmul.f32 %v272, 1.442695
    %v281 = vpow.pop %v280
    %v282 = vmul.f32 %v273, 1.442695
    %v283 = vpow.pop %v282
    %v284 = vmul.f32 %v274, 1.442695
    %v285 = vpow.pop %v284
    %v286 = vmul.f32 %v275, 1.442695
    %v287 = vpow.pop %v286
    %v288 = vmul.f32 %v276, 1.442695
    %v289 = vpow.pop %v288
    %v290 = vmul.f32 %v277, 1.442695
    %v291 = vpow.pop %v290
    %v292 = vmul.f32 %v278, 1.442695
    %v293 = vpow.pop %v292
    %v294 = vmul.f32 %v279, 1.442695
    %v295 = vpow.pop %v294
    %304 = vset.pattern.permute.xlu0 0
    %305 = vperm.xlu0 %304, %v281
    %v306 = vpop.permute.xlu0 %305
    %307 = vset.pattern.permute.xlu0 0
    %308 = vperm.xlu0 %307, %v283
    %v309 = vpop.permute.xlu0 %308
    %310 = vset.pattern.permute.xlu0 0
    %311 = vperm.xlu0 %310, %v285
    %v312 = vpop.permute.xlu0 %311
    %313 = vset.pattern.permute.xlu0 0
    %314 = vperm.xlu0 %313, %v287
    %v315 = vpop.permute.xlu0 %314
    %316 = vset.pattern.permute.xlu0 0
    %317 = vperm.xlu0 %316, %v289
    %v318 = vpop.permute.xlu0 %317
    %319 = vset.pattern.permute.xlu0 0
    %320 = vperm.xlu0 %319, %v291
    %v321 = vpop.permute.xlu0 %320
    %322 = vset.pattern.permute.xlu0 0
    %323 = vperm.xlu0 %322, %v293
    %v324 = vpop.permute.xlu0 %323
    %325 = vset.pattern.permute.xlu0 0
    %326 = vperm.xlu0 %325, %v295
    %v327 = vpop.permute.xlu0 %326
    %v328 = vlaneseq
    %v329 = vshrl.u32 %v328, 7
    %v330 = vsub.s32 %v179, %v329
    %v331 = vrot.slane %v306, %v330
    %v332 = vlaneseq
    %v333 = vshrl.u32 %v332, 7
    %v334 = vsub.s32 %v179, %v333
    %v335 = vrot.slane %v309, %v334
    %v336 = vlaneseq
    %v337 = vshrl.u32 %v336, 7
    %v338 = vsub.s32 %v179, %v337
    %v339 = vrot.slane %v312, %v338
    %v340 = vlaneseq
    %v341 = vshrl.u32 %v340, 7
    %v342 = vsub.s32 %v179, %v341
    %v343 = vrot.slane %v315, %v342
    %v344 = vlaneseq
    %v345 = vshrl.u32 %v344, 7
    %v346 = vsub.s32 %v179, %v345
    %v347 = vrot.slane %v318, %v346
    %v348 = vlaneseq
    %v349 = vshrl.u32 %v348, 7
    %v350 = vsub.s32 %v179, %v349
    %v351 = vrot.slane %v321, %v350
    %v352 = vlaneseq
    %v353 = vshrl.u32 %v352, 7
    %v354 = vsub.s32 %v179, %v353
    %v355 = vrot.slane %v324, %v354
    %v356 = vlaneseq
    %v357 = vshrl.u32 %v356, 7
    %v358 = vsub.s32 %v179, %v357
    %v359 = vrot.slane %v327, %v358
    %v360 = vsel %vm212, %v335, %v331
    %v361 = vsel %vm214, %v339, %v360
    %v362 = vsel %vm216, %v343, %v361
    %v363 = vsel %vm218, %v347, %v362
    %v364 = vsel %vm220, %v351, %v363
    %v365 = vsel %vm222, %v355, %v364
    %v366 = vsel %vm224, %v359, %v365
    %v368 = vsel %vm227, %v366, 0.0
    %369 = vadd.xlane.f32.xlu0 %v368
    %v370 = vpop.xlane.xlu0 %369
    %v371 = vrcp.pop %v370
    %v373 = vlaneseq
    %v374 = vshrl.u32 %v373, 7
    %v375 = vsub.s32 0, %v374
    %v376 = vrot.slane %v371, %v375
    %v377 = vlaneseq
    %v378 = vshrl.u32 %v377, 7
    %v379 = vsub.s32 1, %v378
    %v380 = vrot.slane %v371, %v379
    %v381 = vlaneseq
    %v382 = vshrl.u32 %v381, 7
    %v383 = vsub.s32 2, %v382
    %v384 = vrot.slane %v371, %v383
    %v385 = vlaneseq
    %v386 = vshrl.u32 %v385, 7
    %v387 = vsub.s32 3, %v386
    %v388 = vrot.slane %v371, %v387
    %v389 = vlaneseq
    %v390 = vshrl.u32 %v389, 7
    %v391 = vsub.s32 4, %v390
    %v392 = vrot.slane %v371, %v391
    %v393 = vlaneseq
    %v394 = vshrl.u32 %v393, 7
    %v395 = vsub.s32 5, %v394
    %v396 = vrot.slane %v371, %v395
    %v397 = vlaneseq
    %v398 = vshrl.u32 %v397, 7
    %v399 = vsub.s32 6, %v398
    %v400 = vrot.slane %v371, %v399
    %v401 = vlaneseq
    %v402 = vshrl.u32 %v401, 7
    %v403 = vsub.s32 7, %v402
    %v404 = vrot.slane %v371, %v403
    %v413 = vmul.f32 %v281, %v376
    %v414 = vmul.f32 %v283, %v380
    %v415 = vmul.f32 %v285, %v384
    %v416 = vmul.f32 %v287, %v388
    %v417 = vmul.f32 %v289, %v392
    %v418 = vmul.f32 %v291, %v396
    %v419 = vmul.f32 %v293, %v400
    %v420 = vmul.f32 %v295, %v404
    %422 = vset.pattern.permute.xlu0 0
    %423 = vperm.xlu0 %422, %v413
    %v424 = vpop.permute.xlu0 %423
    %427 = vset.pattern.permute.xlu0 0
    %428 = vperm.xlu0 %427, %v414
    %v429 = vpop.permute.xlu0 %428
    %432 = vset.pattern.permute.xlu0 0
    %433 = vperm.xlu0 %432, %v415
    %v434 = vpop.permute.xlu0 %433
    %437 = vset.pattern.permute.xlu0 0
    %438 = vperm.xlu0 %437, %v416
    %v439 = vpop.permute.xlu0 %438
    %442 = vset.pattern.permute.xlu0 0
    %443 = vperm.xlu0 %442, %v417
    %v444 = vpop.permute.xlu0 %443
    %447 = vset.pattern.permute.xlu0 0
    %448 = vperm.xlu0 %447, %v418
    %v449 = vpop.permute.xlu0 %448
    %452 = vset.pattern.permute.xlu0 0
    %453 = vperm.xlu0 %452, %v419
    %v454 = vpop.permute.xlu0 %453
    %457 = vset.pattern.permute.xlu0 0
    %458 = vperm.xlu0 %457, %v420
    %v459 = vpop.permute.xlu0 %458
    %v461 = vmul.f32 %v424, %v38
    %v462 = vmul.f32 %v429, %v39
    %v463 = vmul.f32 %v434, %v40
    %v464 = vmul.f32 %v439, %v41
    %v465 = vmul.f32 %v444, %v42
    %v466 = vmul.f32 %v449, %v43
    %v467 = vmul.f32 %v454, %v44
    %v468 = vmul.f32 %v459, %v45
    %v469 = vsel %vm145, %v461, 0.0
    %v470 = vrot.slane %v469, 4
    %v471 = vadd.f32 %v469, %v470
    %v472 = vrot.slane %v471, 2
    %v473 = vadd.f32 %v471, %v472
    %v474 = vrot.slane %v473, 1
    %v475 = vadd.f32 %v473, %v474
    %v476 = vsel %vm145, %v462, 0.0
    %v477 = vrot.slane %v476, 4
    %v478 = vadd.f32 %v476, %v477
    %v479 = vrot.slane %v478, 2
    %v480 = vadd.f32 %v478, %v479
    %v481 = vrot.slane %v480, 1
    %v482 = vadd.f32 %v480, %v481
    %v483 = vsel %vm145, %v463, 0.0
    %v484 = vrot.slane %v483, 4
    %v485 = vadd.f32 %v483, %v484
    %v486 = vrot.slane %v485, 2
    %v487 = vadd.f32 %v485, %v486
    %v488 = vrot.slane %v487, 1
    %v489 = vadd.f32 %v487, %v488
    %v490 = vsel %vm145, %v464, 0.0
    %v491 = vrot.slane %v490, 4
    %v492 = vadd.f32 %v490, %v491
    %v493 = vrot.slane %v492, 2
    %v494 = vadd.f32 %v492, %v493
    %v495 = vrot.slane %v494, 1
    %v496 = vadd.f32 %v494, %v495
    %v497 = vsel %vm145, %v465, 0.0
    %v498 = vrot.slane %v497, 4
    %v499 = vadd.f32 %v497, %v498
    %v500 = vrot.slane %v499, 2
    %v501 = vadd.f32 %v499, %v500
    %v502 = vrot.slane %v501, 1
    %v503 = vadd.f32 %v501, %v502
    %v504 = vsel %vm145, %v466, 0.0
    %v505 = vrot.slane %v504, 4
    %v506 = vadd.f32 %v504, %v505
    %v507 = vrot.slane %v506, 2
    %v508 = vadd.f32 %v506, %v507
    %v509 = vrot.slane %v508, 1
    %v510 = vadd.f32 %v508, %v509
    %v511 = vsel %vm145, %v467, 0.0
    %v512 = vrot.slane %v511, 4
    %v513 = vadd.f32 %v511, %v512
    %v514 = vrot.slane %v513, 2
    %v515 = vadd.f32 %v513, %v514
    %v516 = vrot.slane %v515, 1
    %v517 = vadd.f32 %v515, %v516
    %v518 = vsel %vm145, %v468, 0.0
    %v519 = vrot.slane %v518, 4
    %v520 = vadd.f32 %v518, %v519
    %v521 = vrot.slane %v520, 2
    %v522 = vadd.f32 %v520, %v521
    %v523 = vrot.slane %v522, 1
    %v524 = vadd.f32 %v522, %v523
    %v533 = vsel %vm212, %v482, %v475
    %v534 = vsel %vm214, %v489, %v533
    %v535 = vsel %vm216, %v496, %v534
    %v536 = vsel %vm218, %v503, %v535
    %v537 = vsel %vm220, %v510, %v536
    %v538 = vsel %vm222, %v517, %v537
    %v539 = vsel %vm224, %v524, %v538
    %541 = vst.msk [vmem:[#allocation7] sm:$0xff] %vm145, %v539
    // Predicated region
    $region18: #{tpu_custom_call.1} parent=1 // pred_check
      _
    $region19: #{tpu_custom_call.1} parent=1 // pred_check_branch
      %543 = sbr.rel (0) target = $region21
    $region20: #{tpu_custom_call.1} parent=1 // pred_region
      %s545 = ssub.s32 128, 128
      %546 = vsyncadd [#allocation4], %s545
      %s548 = sshll.u32 [#allocation7], 4
      %s549 = int_to_ptr.vmem [resolvable:$true] %s548
      %551 = dma.vmem_to_hbm [thread:$0]  %s549, 128, %s2, [#allocation4]
    $region21: #{tpu_custom_call.1} parent=1 // pred_fallthru
      _
    // Predicated region
    $region22: #{tpu_custom_call.1} parent=1 // pred_check
      _
    $region23: #{tpu_custom_call.1} parent=1 // pred_check_branch
      %553 = sbr.rel (0) target = $region25
    $region24: #{tpu_custom_call.1} parent=1 // pred_region
      %554 = dma.done [#allocation4], 128
    $region25: #{tpu_custom_call.1} parent=1 // pred_fallthru
      _
    %555 = vsyncpa [#allocation3], 1
    %556 = vsyncpa [#allocation6], 1
    %557 = vsyncpa [#allocation4], 1

</llo_original>
